<compile_context>
chip_gen: v5e
topology: v5e:2x2
jax: 0.10.0
libtpu: 0.0.40
codegen_flags: <defaults>
</compile_context>

<pallas_src>
import functools
import math

import jax
import jax.numpy as jnp
from jax.experimental import pallas as pl
from jax.experimental.pallas import tpu as pltpu


def _ls_ce_kernel(preds_ref, tgt_ref, weight_ref, out_ref, *,
                  n_valid: int, tile_n: int,
                  smooth_val: float, confidence: float, ent_const: float,
                  use_weight: bool):
    i = pl.program_id(0)

    logits = preds_ref[...].astype(jnp.float32)                    # (tn, C)
    tn, c = logits.shape

    # --- log_softmax pieces (row-wise, lanes = classes) ---
    m = jnp.max(logits, axis=-1, keepdims=True)                    # (tn, 1)
    shifted = logits - m                                           # (tn, C)
    sum_exp = jnp.sum(jnp.exp(shifted), axis=-1, keepdims=True)    # (tn, 1)
    lse = jnp.log(sum_exp)                                         # (tn, 1)
    sum_shifted = jnp.sum(shifted, axis=-1, keepdims=True)         # (tn, 1)

    # --- pick log_preds[target] via onehot masked reduce ---
    tgt = tgt_ref[...]                                             # (tn, 1) int32
    col = jax.lax.broadcasted_iota(jnp.int32, shifted.shape, 1)    # (tn, C)
    onehot = col == tgt                                            # (tn, C)
    shifted_tgt = jnp.sum(jnp.where(onehot, shifted, 0.0),
                          axis=-1, keepdims=True)                  # (tn, 1)

    lp_tgt = shifted_tgt - lse                                     # (tn, 1)
    sum_lp = sum_shifted - jnp.float32(c) * lse                    # (tn, 1)

    if use_weight:
        w = weight_ref[...].astype(jnp.float32)                    # (1, C)
        w_r = jnp.sum(jnp.where(onehot, w, 0.0),
                      axis=-1, keepdims=True)                      # (tn, 1)
        log_w = jnp.where(w_r > 0,
                          jnp.log(jnp.where(w_r > 0, w_r, 1.0)),
                          0.0)                                     # (tn, 1)
    else:
        w_r = jnp.float32(1.0)
        log_w = jnp.float32(0.0)

    # row KL:  w_r*(log w_r + K) - w_r*((conf - sv)*lp_tgt + sv*sum_lp)
    cross = (jnp.float32(confidence - smooth_val) * lp_tgt
             + jnp.float32(smooth_val) * sum_lp)                   # (tn, 1)
    row_loss = w_r * ((log_w + jnp.float32(ent_const)) - cross)    # (tn, 1)

    # mask rows added by batch padding
    row_idx = i * tile_n + jax.lax.broadcasted_iota(jnp.int32, (tn, 1), 0)
    row_loss = jnp.where(row_idx < n_valid, row_loss, 0.0)

    out_ref[...] = row_loss                                        # (tile_n, 1)


def _choose_tile_n(n: int, c: int, itemsize: int) -> int:
    # Keep double-buffered preds well inside scoped VMEM on every generation
    # (v7x: 64 MiB physical; v5e/v6e defaults raised via vmem_limit_bytes below).
    per_buf_budget = 4 * 1024 * 1024                 # bytes per preds pipeline buffer
    rows = per_buf_budget // max(1, c * itemsize)
    rows = max(16, (rows // 16) * 16)                # multiple of 16 (bf16-safe sublanes)
    rows = min(rows, 1024)
    n_pad16 = ((n + 15) // 16) * 16
    return min(rows, n_pad16)


def label_smoothing_cross_entropy(preds, targets, weight=None, smoothing: float = 0.1):
    """preds: (N, C) float logits; targets: (N,) int class ids or (N, C) one-hot."""
    assert preds.shape[0] == targets.shape[0]
    n, c = preds.shape

    if targets.ndim > 1:
        targets = jnp.argmax(targets, axis=1)
    targets = targets.astype(jnp.int32).reshape(n, 1)

    use_weight = weight is not None
    if weight is None:
        weight = jnp.ones((c,), jnp.float32)
    weight = weight.astype(jnp.float32).reshape(1, c)

    itemsize = jnp.dtype(preds.dtype).itemsize
    tile_n = _choose_tile_n(n, c, itemsize)
    n_pad = ((n + tile_n - 1) // tile_n) * tile_n
    if n_pad != n:
        preds = jnp.pad(preds, ((0, n_pad - n), (0, 0)))
        targets = jnp.pad(targets, ((0, n_pad - n), (0, 0)))

    confidence = 1.0 - smoothing
    # NOTE: C == 1 is degenerate for label smoothing (as in the PyTorch spec); guard the div.
    smooth_val = smoothing / (c - 1) if c > 1 else 0.0
    # K = conf*log(conf) + smoothing*log(smooth_val), with 0*log(0) := 0
    ent_const = (confidence * math.log(confidence) if confidence > 0 else 0.0)
    ent_const += (smoothing * math.log(smooth_val) if (smoothing > 0 and smooth_val > 0) else 0.0)

    kernel = functools.partial(
        _ls_ce_kernel,
        n_valid=n,
        tile_n=tile_n,
        smooth_val=float(smooth_val),
        confidence=float(confidence),
        ent_const=float(ent_const),
        use_weight=use_weight,
    )

    grid = (n_pad // tile_n,)
    cost = pl.CostEstimate(
        flops=8 * n_pad * c,
        transcendentals=n_pad * c + 3 * n_pad,
        bytes_accessed=n_pad * c * itemsize + n_pad * 4 + c * 4 + n_pad * 4,
    )

    per_row = pl.pallas_call(
        kernel,
        out_shape=jax.ShapeDtypeStruct((n_pad, 1), jnp.float32),
        grid_spec=pltpu.PrefetchScalarGridSpec(
            num_scalar_prefetch=0,
            grid=grid,
            in_specs=[
                pl.BlockSpec((tile_n, c), lambda i: (i, 0)),   # preds tile (dtype preserved)
                pl.BlockSpec((tile_n, 1), lambda i: (i, 0)),   # target ids tile
                pl.BlockSpec((1, c), lambda i: (0, 0)),        # class weights (same block every step)
            ],
            out_specs=pl.BlockSpec((tile_n, 1), lambda i: (i, 0)),  # per-sample losses
        ),
        compiler_params=pltpu.CompilerParams(
            dimension_semantics=("parallel",),                 # no serial accumulator -> megacore OK
            vmem_limit_bytes=32 * 1024 * 1024,
        ),
        cost_estimate=cost,
    )(preds, targets, weight)

    # 'batchmean': sum over everything / original batch size (padded rows contribute 0).
    return jnp.sum(per_row) / jnp.float32(n)


def _reference(preds, targets, weight, smoothing):
    # Pure-JAX mirror of the PyTorch module, for correctness checking.
    if targets.ndim > 1:
        targets = jnp.argmax(targets, axis=1)
    targets = targets.astype(jnp.int32)
    n, c = preds.shape
    log_preds = jax.nn.log_softmax(preds.astype(jnp.float32), axis=-1)
    true_dist = jnp.full((n, c), smoothing / (c - 1), jnp.float32)
    true_dist = true_dist.at[jnp.arange(n), targets].set(1.0 - smoothing)
    if weight is not None:
        true_dist = true_dist * weight[targets][:, None]
    kl = jnp.where(true_dist > 0,
                   true_dist * (jnp.log(jnp.where(true_dist > 0, true_dist, 1.0)) - log_preds),
                   0.0)
    return jnp.sum(kl) / n


if __name__ == "__main__":
    key = jax.random.PRNGKey(0)
    k1, k2, k3, k4, k5 = jax.random.split(key, 5)

    # Case 1: weighted classes, batch exactly one tile
    N, C = 16, 32
    preds = jax.random.normal(k1, (N, C), jnp.float32) * 2.0
    targets = jax.random.randint(k2, (N,), 0, C, jnp.int32)
    class_weight = 0.5 + jax.random.uniform(k3, (C,), jnp.float32)

    loss = label_smoothing_cross_entropy(preds, targets, weight=class_weight, smoothing=0.1)
    loss = jax.block_until_ready(loss)
    ref = _reference(preds, targets, class_weight, 0.1)
    assert jnp.allclose(loss, ref, rtol=1e-5, atol=1e-5), (loss, ref)

    # Case 2: no class weights, batch not a multiple of the tile (exercises padding mask)
    N2 = 12
    preds2 = jax.random.normal(k4, (N2, C), jnp.float32) * 2.0
    targets2 = jax.random.randint(k5, (N2,), 0, C, jnp.int32)
    loss2 = label_smoothing_cross_entropy(preds2, targets2, weight=None, smoothing=0.1)
    loss2 = jax.block_until_ready(loss2)
    ref2 = _reference(preds2, targets2, None, 0.1)
    assert jnp.allclose(loss2, ref2, rtol=1e-5, atol=1e-5), (loss2, ref2)

    print("KERNEL_OK")
</pallas_src>

<mosaic_0001>
module attributes {stable_mosaic.version = 11 : i64} {
  func.func @_ls_ce_kernel(%arg0: i32, %arg1: memref<16x32xf32, #tpu.memory_space<vmem>>, %arg2: memref<16x1xi32, #tpu.memory_space<vmem>>, %arg3: memref<1x32xf32, #tpu.memory_space<vmem>>, %arg4: memref<16x1xf32, #tpu.memory_space<vmem>>) attributes {dimension_semantics = [#tpu.dimension_semantics<parallel>], iteration_bounds = array<i64: 1>, scalar_prefetch = 0 : i64, scratch_operands = 0 : i64, tpu.core_type = #tpu.core_type<tc>, window_params = [{transform_indices = @transform_0, window_bounds = array<i64: 16, 32>}, {transform_indices = @transform_1, window_bounds = array<i64: 16, 1>}, {pipeline_mode = #tpu.pipeline_mode<synchronous>, transform_indices = @transform_2, window_bounds = array<i64: 1, 32>}, {transform_indices = @transform_3, window_bounds = array<i64: 16, 1>}]} {
    %c0 = arith.constant 0 : index
    %c0_0 = arith.constant 0 : index
    %0 = vector.load %arg1[%c0, %c0_0] : memref<16x32xf32, #tpu.memory_space<vmem>>, vector<16x32xf32>
    %cst = arith.constant dense<0xFF800000> : vector<16xf32>
    %1 = vector.multi_reduction <maximumf>, %0, %cst [1] : vector<16x32xf32> to vector<16xf32>
    %2 = vector.shape_cast %1 : vector<16xf32> to vector<16x1xf32>
    %3 = vector.broadcast %2 : vector<16x1xf32> to vector<16x32xf32>
    %4 = arith.subf %0, %3 : vector<16x32xf32>
    %5 = math.exp %4 : vector<16x32xf32>
    %cst_1 = arith.constant dense<0.000000e+00> : vector<16xf32>
    %6 = vector.multi_reduction <add>, %5, %cst_1 [1] : vector<16x32xf32> to vector<16xf32>
    %7 = vector.shape_cast %6 : vector<16xf32> to vector<16x1xf32>
    %8 = math.log %7 : vector<16x1xf32>
    %cst_2 = arith.constant dense<0.000000e+00> : vector<16xf32>
    %9 = vector.multi_reduction <add>, %4, %cst_2 [1] : vector<16x32xf32> to vector<16xf32>
    %10 = vector.shape_cast %9 : vector<16xf32> to vector<16x1xf32>
    %c0_3 = arith.constant 0 : index
    %c0_4 = arith.constant 0 : index
    %11 = vector.load %arg2[%c0_3, %c0_4] : memref<16x1xi32, #tpu.memory_space<vmem>>, vector<16x1xi32>
    %12 = tpu.iota {dimensions = array<i32: 1>} : vector<16x32xi32>
    %13 = vector.broadcast %11 : vector<16x1xi32> to vector<16x32xi32>
    %14 = arith.cmpi eq, %12, %13 : vector<16x32xi32>
    %cst_5 = arith.constant 0.000000e+00 : f32
    %15 = vector.broadcast %cst_5 : f32 to vector<16x32xf32>
    %16 = arith.select %14, %4, %15 : vector<16x32xi1>, vector<16x32xf32>
    %cst_6 = arith.constant dense<0.000000e+00> : vector<16xf32>
    %17 = vector.multi_reduction <add>, %16, %cst_6 [1] : vector<16x32xf32> to vector<16xf32>
    %18 = vector.shape_cast %17 : vector<16xf32> to vector<16x1xf32>
    %19 = arith.subf %18, %8 : vector<16x1xf32>
    %cst_7 = arith.constant 3.200000e+01 : f32
    %20 = vector.broadcast %cst_7 : f32 to vector<16x1xf32>
    %21 = arith.mulf %20, %8 : vector<16x1xf32>
    %22 = arith.subf %10, %21 : vector<16x1xf32>
    %c0_8 = arith.constant 0 : index
    %c0_9 = arith.constant 0 : index
    %23 = vector.load %arg3[%c0_8, %c0_9] : memref<1x32xf32, #tpu.memory_space<vmem>>, vector<1x32xf32>
    %cst_10 = arith.constant 0.000000e+00 : f32
    %24 = vector.shape_cast %23 : vector<1x32xf32> to vector<1x32xf32>
    %25 = vector.broadcast %24 : vector<1x32xf32> to vector<16x32xf32>
    %26 = vector.broadcast %cst_10 : f32 to vector<16x32xf32>
    %27 = arith.select %14, %25, %26 : vector<16x32xi1>, vector<16x32xf32>
    %cst_11 = arith.constant dense<0.000000e+00> : vector<16xf32>
    %28 = vector.multi_reduction <add>, %27, %cst_11 [1] : vector<16x32xf32> to vector<16xf32>
    %29 = vector.shape_cast %28 : vector<16xf32> to vector<16x1xf32>
    %cst_12 = arith.constant 0.000000e+00 : f32
    %30 = vector.broadcast %cst_12 : f32 to vector<16x1xf32>
    %31 = arith.cmpf ogt, %29, %30 : vector<16x1xf32>
    %cst_13 = arith.constant 0.000000e+00 : f32
    %32 = vector.broadcast %cst_13 : f32 to vector<16x1xf32>
    %33 = arith.cmpf ogt, %29, %32 : vector<16x1xf32>
    %cst_14 = arith.constant 1.000000e+00 : f32
    %34 = vector.broadcast %cst_14 : f32 to vector<16x1xf32>
    %35 = arith.select %33, %29, %34 : vector<16x1xi1>, vector<16x1xf32>
    %36 = math.log %35 : vector<16x1xf32>
    %cst_15 = arith.constant 0.000000e+00 : f32
    %37 = vector.broadcast %cst_15 : f32 to vector<16x1xf32>
    %38 = arith.select %31, %36, %37 : vector<16x1xi1>, vector<16x1xf32>
    %cst_16 = arith.constant 0.896774172 : f32
    %39 = vector.broadcast %cst_16 : f32 to vector<16x1xf32>
    %40 = arith.mulf %39, %19 : vector<16x1xf32>
    %cst_17 = arith.constant 0.0032258064 : f32
    %41 = vector.broadcast %cst_17 : f32 to vector<16x1xf32>
    %42 = arith.mulf %41, %22 : vector<16x1xf32>
    %43 = arith.addf %40, %42 : vector<16x1xf32>
    %cst_18 = arith.constant -0.668481708 : f32
    %44 = vector.broadcast %cst_18 : f32 to vector<16x1xf32>
    %45 = arith.addf %38, %44 : vector<16x1xf32>
    %46 = arith.subf %45, %43 : vector<16x1xf32>
    %47 = arith.mulf %29, %46 : vector<16x1xf32>
    %c16_i32 = arith.constant 16 : i32
    %48 = arith.muli %arg0, %c16_i32 : i32
    %49 = tpu.iota {dimensions = array<i32: 0>} : vector<16x1xi32>
    %50 = vector.broadcast %48 : i32 to vector<16x1xi32>
    %51 = arith.addi %50, %49 : vector<16x1xi32>
    %c16_i32_19 = arith.constant 16 : i32
    %52 = vector.broadcast %c16_i32_19 : i32 to vector<16x1xi32>
    %53 = arith.cmpi slt, %51, %52 : vector<16x1xi32>
    %cst_20 = arith.constant 0.000000e+00 : f32
    %54 = vector.broadcast %cst_20 : f32 to vector<16x1xf32>
    %55 = arith.select %53, %47, %54 : vector<16x1xi1>, vector<16x1xf32>
    %c0_21 = arith.constant 0 : index
    %c0_22 = arith.constant 0 : index
    %56 = vector.load %arg4[%c0_21, %c0_22] : memref<16x1xf32, #tpu.memory_space<vmem>>, vector<16x1xf32>
    tpu.vector_store %arg4[%c0_21, %c0_22], %55 {strides = array<i32>} : memref<16x1xf32, #tpu.memory_space<vmem>>, vector<16x1xf32>,
    return
  }
  func.func @transform_0(%arg0: i32) -> (i32, i32) {
    %c0_i32 = arith.constant 0 : i32
    %c0_i32_0 = arith.constant 0 : i32
    return %arg0, %c0_i32 : i32, i32
  }
  func.func @transform_1(%arg0: i32) -> (i32, i32) {
    %c0_i32 = arith.constant 0 : i32
    %c0_i32_0 = arith.constant 0 : i32
    return %arg0, %c0_i32 : i32, i32
  }
  func.func @transform_2(%arg0: i32) -> (i32, i32) {
    %c0_i32 = arith.constant 0 : i32
    %c0_i32_0 = arith.constant 0 : i32
    %c0_i32_1 = arith.constant 0 : i32
    return %c0_i32, %c0_i32_0 : i32, i32
  }
  func.func @transform_3(%arg0: i32) -> (i32, i32) {
    %c0_i32 = arith.constant 0 : i32
    %c0_i32_0 = arith.constant 0 : i32
    return %arg0, %c0_i32 : i32, i32
  }
}

</mosaic_0001>

<llo_original>
// kernel: tpu_custom_call.1
$region0: #{tpu_custom_call.1}
  #allocation0 [shape = 'u32[]', space=smem, size = 0x4, offset = 0x4, fixed_abs, tag = 'smem constant byte address 0x4 - core index']
  #allocation1 [shape = 'u32[72,128]{1,0:T(1,128)}', space=vmem, size = 0x9000, scoped, tag = 'internal scratch']
  %s0 = inlined_call_operand.vmem [shape: f32[16,32], index: 0, kind: input, shape index: {}]
  %s1 = inlined_call_operand.vmem [shape: s32[16,1], index: 1, kind: input, shape index: {}]
  %s2 = inlined_call_operand.vmem [shape: f32[1,32], index: 2, kind: input, shape index: {}]
  %s3 = inlined_call_operand.vmem [shape: f32[16,1], index: 3, kind: output, shape index: {}]
  %s4 = sld [smem:[#allocation0]]
  $region22: #{tpu_custom_call.1} parent=0
    _
  %s6 = ssub.s32 1, %s4
  %s7 = scalar_select 0, %s6, %s4
  // Predicated region
  $region2: #{tpu_custom_call.1} parent=0 // pred_check
    _
  $region3: #{tpu_custom_call.1} parent=0 // pred_check_branch
    %9 = sbr.rel (0) target = $region5
  $region4: #{tpu_custom_call.1} parent=0 // pred_region
    _
  $region5: #{tpu_custom_call.1} parent=0 // pred_fallthru
    _
  // Predicated region
  $region6: #{tpu_custom_call.1} parent=0 // pred_check
    _
  $region7: #{tpu_custom_call.1} parent=0 // pred_check_branch
    %11 = sbr.rel (0) target = $region9
  $region8: #{tpu_custom_call.1} parent=0 // pred_region
    _
  $region9: #{tpu_custom_call.1} parent=0 // pred_fallthru
    _
  // Predicated region
  $region10: #{tpu_custom_call.1} parent=0 // pred_check
    _
  $region11: #{tpu_custom_call.1} parent=0 // pred_check_branch
    %13 = sbr.rel (0) target = $region13
  $region12: #{tpu_custom_call.1} parent=0 // pred_region
    _
  $region13: #{tpu_custom_call.1} parent=0 // pred_fallthru
    _
  %v14 = vld [vmem:[%s0] sm:$0xff]
  %v15 = vld [vmem:[%s0 + $0x8] sm:$0xff]
  %vm16 = vcmask 261120
  %v17 = vsel %vm16, %v14, -inf
  %18 = vmax.xlane.f32.xlu0 %v17
  %v19 = vpop.xlane.xlu0 %18
  %v20 = vsel %vm16, %v15, -inf
  %21 = vmax.xlane.f32.xlu0 %v20
  %v22 = vpop.xlane.xlu0 %21
  %v23 = vsub.f32 %v14, %v19
  %v24 = vsub.f32 %v15, %v22
  %v25 = vmul.f32 %v23, 1.442695
  %v26 = vpow.pop %v25
  %v27 = vmul.f32 %v24, 1.442695
  %v28 = vpow.pop %v27
  %v29 = vsel %vm16, %v26, 0.0
  %30 = vadd.xlane.f32.xlu0 %v29
  %v31 = vpop.xlane.xlu0 %30
  %v32 = vsel %vm16, %v28, 0.0
  %33 = vadd.xlane.f32.xlu0 %v32
  %v34 = vpop.xlane.xlu0 %33
  %v35 = vlog2.pop %v31
  %v36 = vmul.f32 %v35, 0.6931472
  %v37 = vlog2.pop %v34
  %v38 = vmul.f32 %v37, 0.6931472
  %v39 = vsel %vm16, %v23, 0.0
  %40 = vadd.xlane.f32.xlu0 %v39
  %v41 = vpop.xlane.xlu0 %40
  %v42 = vsel %vm16, %v24, 0.0
  %43 = vadd.xlane.f32.xlu0 %v42
  %v44 = vpop.xlane.xlu0 %43
  %v45 = vld [vmem:[%s1] sm:$0xff]
  %v46 = vld [vmem:[%s1 + $0x8] sm:$0xff]
  %v47 = vlaneseq
  %v48 = vand.u32 %v47, 127
  %49 = vset.pattern.permute.xlu0 0
  %50 = vperm.xlu0 %49, %v45
  %v51 = vpop.permute.xlu0 %50
  %52 = vset.pattern.permute.xlu0 0
  %53 = vperm.xlu0 %52, %v46
  %v54 = vpop.permute.xlu0 %53
  %vm55 = vcmp.eq.s32.totalorder %v48, %v51
  %vm56 = vcmp.eq.s32.totalorder %v48, %v54
  %v57 = vsel %vm55, %v23, 0.0
  %v58 = vsel %vm56, %v24, 0.0
  %v59 = vsel %vm16, %v57, 0.0
  %60 = vadd.xlane.f32.xlu0 %v59
  %v61 = vpop.xlane.xlu0 %60
  %v62 = vsel %vm16, %v58, 0.0
  %63 = vadd.xlane.f32.xlu0 %v62
  %v64 = vpop.xlane.xlu0 %63
  %v65 = vsub.f32 %v61, %v36
  %v66 = vsub.f32 %v64, %v38
  %v67 = vmul.f32 %v36, 32.0
  %v68 = vmul.f32 %v38, 32.0
  %v69 = vsub.f32 %v41, %v67
  %v70 = vsub.f32 %v44, %v68
  %v71 = vld [vmem:[%s2] sm:$0x1]
  %v73 = vperm.slane %v71, 0
  %v75 = vsel %vm55, %v73, 0.0
  %v76 = vsel %vm56, %v73, 0.0
  %v77 = vsel %vm16, %v75, 0.0
  %78 = vadd.xlane.f32.xlu0 %v77
  %v79 = vpop.xlane.xlu0 %78
  %v80 = vsel %vm16, %v76, 0.0
  %81 = vadd.xlane.f32.xlu0 %v80
  %v82 = vpop.xlane.xlu0 %81
  %vm83 = vcmp.gt.f32.partialorder %v79, 0.0
  %vm84 = vcmp.gt.f32.partialorder %v82, 0.0
  %v85 = vsel %vm83, %v79, 1.0
  %v86 = vsel %vm84, %v82, 1.0
  %v87 = vlog2.pop %v85
  %v88 = vmul.f32 %v87, 0.6931472
  %v89 = vlog2.pop %v86
  %v90 = vmul.f32 %v89, 0.6931472
  %v91 = vsel %vm83, %v88, 0.0
  %v92 = vsel %vm84, %v90, 0.0
  %v93 = vmul.f32 %v65, 0.8967742
  %v94 = vmul.f32 %v66, 0.8967742
  %v95 = vmul.f32 %v69, 0.0032258064
  %v96 = vmul.f32 %v70, 0.0032258064
  %v97 = vadd.f32 %v93, %v95
  %v98 = vadd.f32 %v94, %v96
  %v99 = vadd.f32 %v91, -0.6684817
  %v100 = vadd.f32 %v92, -0.6684817
  %v101 = vsub.f32 %v99, %v97
  %v102 = vsub.f32 %v100, %v98
  %v103 = vmul.f32 %v79, %v101
  %v104 = vmul.f32 %v82, %v102
  %s105 = smul.u32 0, 16
  %v106 = vlaneseq
  %v107 = vshrl.u32 %v106, 7
  %v108 = vadd.s32 %v107, 8
  %v109 = vstv %s105
  %v110 = vadd.s32 %v109, %v107
  %v111 = vadd.s32 %v109, %v108
  %vm112 = vcmp.lt.s32.totalorder %v110, 16
  %vm113 = vcmp.lt.s32.totalorder %v111, 16
  %v114 = vsel %vm112, %v103, 0.0
  %v115 = vsel %vm113, %v104, 0.0
  %vm116 = vcmask 7168
  %117 = vst.msk [vmem:[%s3] sm:$0xff] %vm116, %v114
  %118 = vst.msk [vmem:[%s3 + $0x8] sm:$0xff] %vm116, %v115
  // Predicated region
  $region14: #{tpu_custom_call.1} parent=0 // pred_check
    _
  $region15: #{tpu_custom_call.1} parent=0 // pred_check_branch
    %120 = sbr.rel (0) target = $region17
  $region16: #{tpu_custom_call.1} parent=0 // pred_region
    _
  $region17: #{tpu_custom_call.1} parent=0 // pred_fallthru
    _
  // Predicated region
  $region18: #{tpu_custom_call.1} parent=0 // pred_check
    _
  $region19: #{tpu_custom_call.1} parent=0 // pred_check_branch
    %122 = sbr.rel (0) target = $region21
  $region20: #{tpu_custom_call.1} parent=0 // pred_region
    _
  $region21: #{tpu_custom_call.1} parent=0 // pred_fallthru
    _

</llo_original>
